<compile_context>
chip_gen: v7x
topology: tpu7x:2x2x1
jax: 0.10.0
libtpu: 0.0.40
codegen_flags: <defaults>
</compile_context>

<pallas_src>
import numpy as np
import jax
import jax.numpy as jnp
from jax.experimental import pallas as pl
from jax.experimental.pallas import tpu as pltpu


def _filter_operator(N, Fs, filter_cutoff_hz, order):
    """Host-side float64 fold of IDFT @ diag(g) @ DFT (real, symmetric)."""
    k = np.arange(N)
    W = np.exp(-2j * np.pi * np.outer(k, k) / N)           # forward DFT matrix
    f = np.fft.fftfreq(N, d=1.0 / Fs)                      # unshifted freqs
    logsqrt2 = np.log(np.sqrt(2.0))
    g = np.exp(-logsqrt2 * (2.0 * f / (2.0 * filter_cutoff_hz)) ** (2 * order))
    M = (np.conj(W) @ (g[:, None] * W)) / N                # ifft(g * fft(.))
    assert np.max(np.abs(M.imag)) < 1e-9                   # real by g-symmetry
    return np.real(M)


def _apply_op_kernel(x_ref, m_ref, o_ref):
    # x_ref: (TB, N) bf16   m_ref: (N, N) bf16   o_ref: (TB, N) f32
    o_ref[...] = jnp.dot(x_ref[...], m_ref[...],
                         preferred_element_type=jnp.float32)


def make_gaussian_fq_filter(N, Fs, filter_cutoff_hz, order, *, tb=128):
    """Returns forward(x) implementing GaussianFqFilter.forward for length-N
    real signals.  x may be (N,) or (B, N); output is complex64 of the same
    leading shape."""
    M = _filter_operator(N, Fs, filter_cutoff_hz, order)
    # out_row = x_row @ M.T  (M is symmetric; pass the transpose explicitly)
    op_bf16 = jnp.asarray(M.T, dtype=jnp.bfloat16)         # (N, N)

    def build_call(bp):
        return pl.pallas_call(
            _apply_op_kernel,
            out_shape=jax.ShapeDtypeStruct((bp, N), jnp.float32),
            grid=(bp // tb,),
            in_specs=[pl.BlockSpec((tb, N), lambda i: (i, 0)),
                      pl.BlockSpec((N, N), lambda i: (0, 0))],  # VMEM-resident
            out_specs=pl.BlockSpec((tb, N), lambda i: (i, 0)),
            compiler_params=pltpu.CompilerParams(
                dimension_semantics=("parallel",)),
        )

    @jax.jit
    def forward(x):
        # TODO(synk): complex-valued input would need the operator applied to
        # Re/Im separately; real input only here (matches typical usage).
        squeeze = (x.ndim == 1)
        x2 = x.reshape(1, N) if squeeze else x
        B = x2.shape[0]
        Bp = ((B + tb - 1) // tb) * tb                     # static under jit
        xp = jnp.zeros((Bp, N), jnp.bfloat16).at[:B, :].set(
            x2.astype(jnp.bfloat16))
        out = build_call(Bp)(xp, op_bf16)[:B]
        out = out.astype(jnp.complex64)                    # imag part == 0 exactly
        return out[0] if squeeze else out

    return forward


def reference_forward(x, Fs, filter_cutoff_hz, order):
    """Straight transcription of the PyTorch forward using jnp.fft."""
    N = x.shape[-1]
    logsqrt2 = np.log(np.sqrt(2.0))
    fqs = jnp.fft.fftshift(jnp.fft.fftfreq(N, 1.0 / Fs))
    filt = jnp.exp(-logsqrt2 * (2 * fqs / (2 * filter_cutoff_hz)) ** (2 * order))
    X = jnp.fft.fftshift(jnp.fft.fft(x, axis=-1), axes=-1) / N
    return jnp.fft.ifft(jnp.fft.ifftshift(X * filt, axes=-1), axis=-1) * N


if __name__ == "__main__":
    N = 128            # signal length (lane-aligned)
    Fs = 100.0         # sampling rate [Hz]
    cutoff = 10.0      # filter cutoff [Hz]
    order = 4
    B = 256            # batch of signals (2 grid steps of TB=128)

    key = jax.random.PRNGKey(0)
    kb, ks = jax.random.split(key)
    xb = jax.random.normal(kb, (B, N), dtype=jnp.float32)   # batched signals
    x1 = jax.random.normal(ks, (N,), dtype=jnp.float32)     # single 1-D signal

    forward = make_gaussian_fq_filter(N, Fs, cutoff, order)

    out_b = jax.block_until_ready(forward(xb))
    out_1 = jax.block_until_ready(forward(x1))

    # sanity checks against jnp.fft reference (atol reflects bf16 operator)
    ref_b = reference_forward(xb, Fs, cutoff, order)
    ref_1 = reference_forward(x1, Fs, cutoff, order)
    np.testing.assert_allclose(np.asarray(out_b), np.asarray(ref_b),
                               rtol=2e-2, atol=2e-2)
    np.testing.assert_allclose(np.asarray(out_1), np.asarray(ref_1),
                               rtol=2e-2, atol=2e-2)

    print("KERNEL_OK")
</pallas_src>

<mosaic_0001>
module attributes {stable_mosaic.version = 11 : i64} {
  func.func @_apply_op_kernel(%arg0: i32, %arg1: memref<128x128xbf16, #tpu.memory_space<vmem>>, %arg2: memref<128x128xbf16, #tpu.memory_space<vmem>>, %arg3: memref<128x128xf32, #tpu.memory_space<vmem>>) attributes {dimension_semantics = [#tpu.dimension_semantics<parallel>], iteration_bounds = array<i64: 2>, scalar_prefetch = 0 : i64, scratch_operands = 0 : i64, tpu.core_type = #tpu.core_type<tc>, window_params = [{transform_indices = @transform_0, window_bounds = array<i64: 128, 128>}, {pipeline_mode = #tpu.pipeline_mode<synchronous>, transform_indices = @transform_1, window_bounds = array<i64: 128, 128>}, {transform_indices = @transform_2, window_bounds = array<i64: 128, 128>}]} {
    %c0 = arith.constant 0 : index
    %c0_0 = arith.constant 0 : index
    %0 = vector.load %arg1[%c0, %c0_0] : memref<128x128xbf16, #tpu.memory_space<vmem>>, vector<128x128xbf16>
    %c0_1 = arith.constant 0 : index
    %c0_2 = arith.constant 0 : index
    %1 = vector.load %arg2[%c0_1, %c0_2] : memref<128x128xbf16, #tpu.memory_space<vmem>>, vector<128x128xbf16>
    %cst = arith.constant dense<0.000000e+00> : vector<128x128xf32>
    %2 = tpu.matmul %0, %1, %cst {dimension_numbers = #tpu.dot_dimension_numbers<[1], [0], [0], [1], [0, 0, 1, 1], [], []>} : vector<128x128xbf16>, vector<128x128xbf16>, vector<128x128xf32> -> vector<128x128xf32>
    %c0_3 = arith.constant 0 : index
    %c0_4 = arith.constant 0 : index
    %3 = vector.load %arg3[%c0_3, %c0_4] : memref<128x128xf32, #tpu.memory_space<vmem>>, vector<128x128xf32>
    tpu.vector_store %arg3[%c0_3, %c0_4], %2 {strides = array<i32>} : memref<128x128xf32, #tpu.memory_space<vmem>>, vector<128x128xf32>,
    return
  }
  func.func @transform_0(%arg0: i32) -> (i32, i32) {
    %c0_i32 = arith.constant 0 : i32
    %c0_i32_0 = arith.constant 0 : i32
    return %arg0, %c0_i32 : i32, i32
  }
  func.func @transform_1(%arg0: i32) -> (i32, i32) {
    %c0_i32 = arith.constant 0 : i32
    %c0_i32_0 = arith.constant 0 : i32
    %c0_i32_1 = arith.constant 0 : i32
    return %c0_i32, %c0_i32_0 : i32, i32
  }
  func.func @transform_2(%arg0: i32) -> (i32, i32) {
    %c0_i32 = arith.constant 0 : i32
    %c0_i32_0 = arith.constant 0 : i32
    return %arg0, %c0_i32 : i32, i32
  }
}

</mosaic_0001>

<llo_original>
// kernel: custom-call
$region0: #{custom-call}
  %s0 = inlined_call_operand.vmem [shape: f32[256,128], index: 0, kind: input, shape index: {}]
  %s1 = inlined_call_operand.vmem [shape: f32[256,128], index: 1, kind: input, shape index: {}]
  %s2 = inlined_call_operand.hbm [shape: c64[256,128], index: 2, kind: output, shape index: {}]
  %s3 = scalar_lea.hbm %s2, 4096
  $region1: #{custom-call} parent=0
    #allocation0 [shape = 's32[1]{0}', space=sflag, size = 0x4, scoped, tag = 'scoped memory for custom-call']
    %4 = vsyncpa [#allocation0], 0
    %s5 = sshll.u32 %s0, 4
    %s6 = int_to_ptr.vmem [resolvable:$true] %s5
    %8 = dma.vmem_to_hbm [thread:$0]  %s6, 4096, %s2, [#allocation0]
    %9 = dma.done [#allocation0], 4096
    %10 = vsyncpa [#allocation0], 1
  $region2: #{custom-call} parent=0
    #allocation1 [shape = 's32[1]{0}', space=sflag, size = 0x4, scoped, tag = 'scoped memory for custom-call']
    %11 = vsyncpa [#allocation1], 0
    %s12 = sshll.u32 %s1, 4
    %s13 = int_to_ptr.vmem [resolvable:$true] %s12
    %15 = dma.vmem_to_hbm [thread:$0]  %s13, 4096, %s3, [#allocation1]
    %16 = dma.done [#allocation1], 4096
    %17 = vsyncpa [#allocation1], 1

// kernel: forward.1
$region0: #{forward.1}
  #allocation0 [shape = 'u32[]', space=smem, size = 0x4, offset = 0x4, fixed_abs, tag = 'smem constant byte address 0x4 - core index']
  #allocation1 [shape = 'u32[144,128]{1,0:T(1,128)}', space=vmem, size = 0x12000, scoped, tag = 'internal scratch']
  %s0 = inlined_call_operand.vmem [shape: bf16[256,128], index: 0, kind: input, shape index: {}]
  %s1 = inlined_call_operand.vmem [shape: bf16[128,128], index: 1, kind: input, shape index: {}]
  %s2 = inlined_call_operand.vmem [shape: f32[256,128], index: 2, kind: output, shape index: {}]
  %s3 = sld [smem:[#allocation0]]
  $region41: #{forward.1} parent=0
    _
  %s5 = ssub.s32 1, %s3
  %s6 = scalar_select 0, %s5, %s3
  loop: start=0, step=1, limit=4
  $region2: #{forward.1} parent=0 // loop_pre_header
    _
  $region3: #{forward.1} parent=0 // loop_header
    %s8 = sphi 0, %s12
    %p9 = scmp.ge.s32.totalorder %s8, 4
    %s18 = sphi 0, %s20
    %s21 = sphi 0, %s18
    %s22 = sphi 0, %s21
    %s38 = sphi 0, %s22
    %s42 = sphi 0, %s42
    %s44 = sphi 0, %s42
    %s45 = sphi 0, %s44
    %s59 = sphi 0, %s45
    %s65 = sphi 0, %s67
    %s68 = sphi 0, %s65
    %s69 = sphi 0, %s68
    %s85 = sphi 0, %s69
  $region4: #{forward.1} parent=0 // loop_header_branch
    %11 = sbr.rel (%p9) target = $region8
  $region5: #{forward.1} parent=0 // loop_body
    %s13 = ssub.s32 %s8, 1
    %s14 = ssub.s32 %s8, 2
    %s15 = sadd.s32 %s8, 1
    %s16 = ssub.s32 %s8, %s15
    %p17 = scmp.eq.s32.totalorder %s16, 0
    %s19 = sadd.s32 %s18, 1
    %s20 = scalar_select %p17, %s18, %s19
    %p23 = pneg %p17
    %p24 = scmp.eq.s32.totalorder %s8, 1
    %p25 = por %p23, %p24
    %p26 = scmp.ne.s32.totalorder %s18, %s21
    %p27 = scmp.eq.s32.totalorder %s8, 0
    %p28 = por %p26, %p27
    %p29 = scmp.ne.s32.totalorder %s18, %s21
    %p30 = scmp.eq.s32.totalorder %s13, 1
    %p31 = por %p29, %p30
    %p32 = scmp.ne.s32.totalorder %s21, %s22
    %p33 = scmp.eq.s32.totalorder %s13, 0
    %p34 = por %p32, %p33
    %p35 = scmp.ne.s32.totalorder %s21, %s22
    %p36 = scmp.eq.s32.totalorder %s14, 1
    %p37 = por %p35, %p36
    %p39 = scmp.ne.s32.totalorder %s22, %s38
    %p40 = scmp.eq.s32.totalorder %s14, 0
    %p41 = por %p39, %p40
    %s43 = sadd.s32 %s42, 1
    %p46 = scmp.eq.s32.totalorder %s8, 1
    %p47 = scmp.ne.s32.totalorder %s42, %s44
    %p48 = scmp.eq.s32.totalorder %s8, 0
    %p49 = por %p47, %p48
    %p50 = scmp.ne.s32.totalorder %s42, %s44
    %p51 = scmp.eq.s32.totalorder %s13, 1
    %p52 = por %p50, %p51
    %p53 = scmp.ne.s32.totalorder %s44, %s45
    %p54 = scmp.eq.s32.totalorder %s13, 0
    %p55 = por %p53, %p54
    %p56 = scmp.ne.s32.totalorder %s44, %s45
    %p57 = scmp.eq.s32.totalorder %s14, 1
    %p58 = por %p56, %p57
    %p60 = scmp.ne.s32.totalorder %s45, %s59
    %p61 = scmp.eq.s32.totalorder %s14, 0
    %p62 = por %p60, %p61
    %s63 = ssub.s32 %s8, %s15
    %p64 = scmp.eq.s32.totalorder %s63, 0
    %s66 = sadd.s32 %s65, 1
    %s67 = scalar_select %p64, %s65, %s66
    %p70 = pneg %p64
    %p71 = scmp.eq.s32.totalorder %s8, 1
    %p72 = por %p70, %p71
    %p73 = scmp.ne.s32.totalorder %s65, %s68
    %p74 = scmp.eq.s32.totalorder %s8, 0
    %p75 = por %p73, %p74
    %p76 = scmp.ne.s32.totalorder %s65, %s68
    %p77 = scmp.eq.s32.totalorder %s13, 1
    %p78 = por %p76, %p77
    %p79 = scmp.ne.s32.totalorder %s68, %s69
    %p80 = scmp.eq.s32.totalorder %s13, 0
    %p81 = por %p79, %p80
    %p82 = scmp.ne.s32.totalorder %s68, %s69
    %p83 = scmp.eq.s32.totalorder %s14, 1
    %p84 = por %p82, %p83
    %p86 = scmp.ne.s32.totalorder %s69, %s85
    %p87 = scmp.eq.s32.totalorder %s14, 0
    %p88 = por %p86, %p87
    %p89 = scmp.le.s32.totalorder 1, %s8
    %p90 = scmp.lt.s32.totalorder %s8, 3
    %p91 = pnand %p89, %p90
    %p92 = pneg %p91
    // Predicated region
    $region9: #{forward.1} parent=5 // pred_check
      _
    $region10: #{forward.1} parent=5 // pred_check_branch
      %94 = sbr.rel (%p91) target = $region12
    $region11: #{forward.1} parent=5 // pred_region
      %s95 = ssub.s32 %s8, 1
      // Predicated region
      $region13: #{forward.1} parent=11 // pred_check
        %p96 = pneg %p55
      $region14: #{forward.1} parent=11 // pred_check_branch
        %98 = sbr.rel (%p96) target = $region16
      $region15: #{forward.1} parent=11 // pred_region
        _
      $region16: #{forward.1} parent=11 // pred_fallthru
        _
    $region12: #{forward.1} parent=5 // pred_fallthru
      _
    %p99 = scmp.lt.s32.totalorder %s8, 2
    // Predicated region
    $region17: #{forward.1} parent=5 // pred_check
      %p100 = pneg %p99
    $region18: #{forward.1} parent=5 // pred_check_branch
      %102 = sbr.rel (%p100) target = $region20
    $region19: #{forward.1} parent=5 // pred_region
      // Predicated region
      $region21: #{forward.1} parent=19 // pred_check
        %p103 = pneg %p28
      $region22: #{forward.1} parent=19 // pred_check_branch
        %105 = sbr.rel (%p103) target = $region24
      $region23: #{forward.1} parent=19 // pred_region
        %s106 = smul.u32 16, %s8
        %p107 = scmp.lt.s32.totalorder %s106, 31
        %s108 = scalar_select %p107, %s106, 31
        %s109 = smul.addr %s108, 4
        %s110 = scalar_lea.vmem %s0, %s109
        %s111 = smul.u32 16, %s8
      $region24: #{forward.1} parent=19 // pred_fallthru
        _
    $region20: #{forward.1} parent=5 // pred_fallthru
      _
    %p112 = scmp.le.s32.totalorder 1, %s8
    %p113 = scmp.lt.s32.totalorder %s8, 3
    %p114 = pnand %p112, %p113
    %p115 = pneg %p114
    // Predicated region
    $region25: #{forward.1} parent=5 // pred_check
      _
    $region26: #{forward.1} parent=5 // pred_check_branch
      %117 = sbr.rel (%p114) target = $region28
    $region27: #{forward.1} parent=5 // pred_region
      %s118 = ssub.s32 %s8, 1
      %s119 = smul.u32 16, %s13
      %p120 = scmp.lt.s32.totalorder %s119, 31
      %s121 = scalar_select %p120, %s119, 31
      %s122 = smul.addr %s121, 4
      %s123 = scalar_lea.vmem %s0, %s122
      %p124 = pneg %p34
      %p125 = pneg %p31
      %p126 = pneg %p55
      %p127 = pneg %p52
      %p128 = pneg %p81
      %p129 = pneg %p78
      %s130 = smul.u32 16, %s13
      %p131 = scmp.lt.s32.totalorder %s130, 31
      %s132 = scalar_select %p131, %s130, 31
      %s133 = smul.addr %s132, 8
      %s134 = scalar_lea.vmem %s2, %s133
      %s135 = smul.u32 16, %s13
      %p136 = scmp.lt.s32.totalorder %s135, 31
      %s137 = scalar_select %p136, %s135, 31
      %s138 = smul.addr %s137, 4
      %s139 = scalar_lea.vmem %s0, %s138
      %s140 = smul.u32 16, %s13
      %s141 = smul.u32 16, %s13
      %p142 = scmp.lt.s32.totalorder %s141, 31
      %s143 = scalar_select %p142, %s141, 31
      %s144 = smul.addr %s143, 8
      %s145 = scalar_lea.vmem %s2, %s144
      %s146 = smul.u32 16, %s13
      %v148 = vld [vmem:[%s139] sm:$0xf]
      %v149 = vld [vmem:[%s139 + $0x4] sm:$0xf]
      %v150 = vld [vmem:[%s139 + $0x8] sm:$0xf]
      %v151 = vld [vmem:[%s139 + $0xc] sm:$0xf]
      %v152 = vld [vmem:[%s139 + $0x10] sm:$0xf]
      %v153 = vld [vmem:[%s139 + $0x14] sm:$0xf]
      %v154 = vld [vmem:[%s139 + $0x18] sm:$0xf]
      %v155 = vld [vmem:[%s139 + $0x1c] sm:$0xf]
      %v156 = vld [vmem:[%s139 + $0x20] sm:$0xf]
      %v157 = vld [vmem:[%s139 + $0x24] sm:$0xf]
      %v158 = vld [vmem:[%s139 + $0x28] sm:$0xf]
      %v159 = vld [vmem:[%s139 + $0x2c] sm:$0xf]
      %v160 = vld [vmem:[%s139 + $0x30] sm:$0xf]
      %v161 = vld [vmem:[%s139 + $0x34] sm:$0xf]
      %v162 = vld [vmem:[%s139 + $0x38] sm:$0xf]
      %v163 = vld [vmem:[%s139 + $0x3c] sm:$0xf]
      %v164 = vld [vmem:[%s1] sm:$0xf]
      %v165 = vld [vmem:[%s1 + $0x4] sm:$0xf]
      %v166 = vld [vmem:[%s1 + $0x8] sm:$0xf]
      %v167 = vld [vmem:[%s1 + $0xc] sm:$0xf]
      %v168 = vld [vmem:[%s1 + $0x10] sm:$0xf]
      %v169 = vld [vmem:[%s1 + $0x14] sm:$0xf]
      %v170 = vld [vmem:[%s1 + $0x18] sm:$0xf]
      %v171 = vld [vmem:[%s1 + $0x1c] sm:$0xf]
      %v172 = vld [vmem:[%s1 + $0x20] sm:$0xf]
      %v173 = vld [vmem:[%s1 + $0x24] sm:$0xf]
      %v174 = vld [vmem:[%s1 + $0x28] sm:$0xf]
      %v175 = vld [vmem:[%s1 + $0x2c] sm:$0xf]
      %v176 = vld [vmem:[%s1 + $0x30] sm:$0xf]
      %v177 = vld [vmem:[%s1 + $0x34] sm:$0xf]
      %v178 = vld [vmem:[%s1 + $0x38] sm:$0xf]
      %v179 = vld [vmem:[%s1 + $0x3c] sm:$0xf]
      %v196 = vunpack.c.l.b16 %v148
      %v197 = vunpack.c.l.b16 %v149
      %v198 = vunpack.c.l.b16 %v150
      %v199 = vunpack.c.l.b16 %v151
      %v200 = vunpack.c.l.b16 %v152
      %v201 = vunpack.c.l.b16 %v153
      %v202 = vunpack.c.l.b16 %v154
      %v203 = vunpack.c.l.b16 %v155
      %v204 = vunpack.c.l.b16 %v156
      %v205 = vunpack.c.l.b16 %v157
      %v206 = vunpack.c.l.b16 %v158
      %v207 = vunpack.c.l.b16 %v159
      %v208 = vunpack.c.l.b16 %v160
      %v209 = vunpack.c.l.b16 %v161
      %v210 = vunpack.c.l.b16 %v162
      %v211 = vunpack.c.l.b16 %v163
      %v212 = vpack.c.b16 %v197, %v196
      %v213 = vpack.c.b16 %v199, %v198
      %v214 = vpack.c.b16 %v201, %v200
      %v215 = vpack.c.b16 %v203, %v202
      %v216 = vpack.c.b16 %v205, %v204
      %v217 = vpack.c.b16 %v207, %v206
      %v218 = vpack.c.b16 %v209, %v208
      %v219 = vpack.c.b16 %v211, %v210
      %v244 = vunpack.c.l.b16 %v164
      %v245 = vunpack.c.l.b16 %v165
      %v246 = vunpack.c.l.b16 %v166
      %v247 = vunpack.c.l.b16 %v167
      %v248 = vunpack.c.l.b16 %v168
      %v249 = vunpack.c.l.b16 %v169
      %v250 = vunpack.c.l.b16 %v170
      %v251 = vunpack.c.l.b16 %v171
      %v252 = vunpack.c.l.b16 %v172
      %v253 = vunpack.c.l.b16 %v173
      %v254 = vunpack.c.l.b16 %v174
      %v255 = vunpack.c.l.b16 %v175
      %v256 = vunpack.c.l.b16 %v176
      %v257 = vunpack.c.l.b16 %v177
      %v258 = vunpack.c.l.b16 %v178
      %v259 = vunpack.c.l.b16 %v179
      %v260 = vpack.c.b16 %v245, %v244
      %v261 = vpack.c.b16 %v247, %v246
      %v262 = vpack.c.b16 %v249, %v248
      %v263 = vpack.c.b16 %v251, %v250
      %v264 = vpack.c.b16 %v253, %v252
      %v265 = vpack.c.b16 %v255, %v254
      %v266 = vpack.c.b16 %v257, %v256
      %v267 = vpack.c.b16 %v259, %v258
      %276 = vmatprep.subr.bf16.mxu0 0
      %277 = vmatpush1.bf16.msra.mxu0 %v260
      %278 = vmatprep.subr.bf16.mxu0 0
      %279 = vmatpush1.bf16.msra.mxu0 %v261
      %280 = vmatprep.subr.bf16.mxu0 0
      %281 = vmatpush1.bf16.msra.mxu0 %v262
      %282 = vmatprep.subr.bf16.mxu0 0
      %283 = vmatpush1.bf16.msra.mxu0 %v263
      %284 = vmatprep.subr.bf16.mxu0 0
      %285 = vmatpush1.bf16.msra.mxu0 %v264
      %286 = vmatprep.subr.bf16.mxu0 0
      %287 = vmatpush1.bf16.msra.mxu0 %v265
      %288 = vmatprep.subr.bf16.mxu0 0
      %289 = vmatpush1.bf16.msra.mxu0 %v266
      %290 = vmatprep.subr.bf16.mxu0 0
      %291 = vmatpush1.bf16.msra.mxu0 %v267
      %292 = vmatprep.subr.bf16.mxu0 0
      %293 = vmatpush1.bf16.msra.mxu0 0
      %294 = vmatprep.subr.bf16.mxu0 0
      %295 = vmatpush1.bf16.msra.mxu0 0
      %296 = vmatprep.subr.bf16.mxu0 0
      %297 = vmatpush1.bf16.msra.mxu0 0
      %298 = vmatprep.subr.bf16.mxu0 0
      %299 = vmatpush1.bf16.msra.mxu0 0
      %300 = vmatprep.subr.bf16.mxu0 0
      %301 = vmatpush1.bf16.msra.mxu0 0
      %302 = vmatprep.subr.bf16.mxu0 0
      %303 = vmatpush1.bf16.msra.mxu0 0
      %304 = vmatprep.subr.bf16.mxu0 0
      %305 = vmatpush1.bf16.msra.mxu0 0
      %306 = vmatprep.subr.bf16.mxu0 0
      %307 = vmatpush1.bf16.msra.mxu0 0
      %308 = vmatprep.mubr.bf16.mxu0 0
      %309 = vmatmul.mubr.bf16.gmra.mrb[0].mxu0 %v212
      %v310 = vpop.f32.mrb[0].mxu0
      %v311 = vadd.f32 0.0, %v310
      %v312 = vpop.f32.mrb[0].mxu0
      %v313 = vpop.f32.mrb[0].mxu0
      %v314 = vadd.f32 0.0, %v313
      %v315 = vpop.f32.mrb[0].mxu0
      %316 = vmatprep.mubr.bf16.mxu0 0
      %317 = vmatmul.mubr.bf16.gmra.mrb[0].mxu0 %v213
      %v318 = vpop.f32.mrb[0].mxu0
      %v319 = vadd.f32 0.0, %v318
      %v320 = vpop.f32.mrb[0].mxu0
      %v321 = vpop.f32.mrb[0].mxu0
      %v322 = vadd.f32 0.0, %v321
      %v323 = vpop.f32.mrb[0].mxu0
      %324 = vmatprep.mubr.bf16.mxu0 0
      %325 = vmatmul.mubr.bf16.gmra.mrb[0].mxu0 %v214
      %v326 = vpop.f32.mrb[0].mxu0
      %v327 = vadd.f32 0.0, %v326
      %v328 = vpop.f32.mrb[0].mxu0
      %v329 = vpop.f32.mrb[0].mxu0
      %v330 = vadd.f32 0.0, %v329
      %v331 = vpop.f32.mrb[0].mxu0
      %332 = vmatprep.mubr.bf16.mxu0 0
      %333 = vmatmul.mubr.bf16.gmra.mrb[0].mxu0 %v215
      %v334 = vpop.f32.mrb[0].mxu0
      %v335 = vadd.f32 0.0, %v334
      %v336 = vpop.f32.mrb[0].mxu0
      %v337 = vpop.f32.mrb[0].mxu0
      %v338 = vadd.f32 0.0, %v337
      %v339 = vpop.f32.mrb[0].mxu0
      %340 = vmatprep.mubr.bf16.mxu0 0
      %341 = vmatmul.mubr.bf16.gmra.mrb[0].mxu0 %v216
      %v342 = vpop.f32.mrb[0].mxu0
      %v343 = vadd.f32 0.0, %v342
      %v344 = vpop.f32.mrb[0].mxu0
      %v345 = vpop.f32.mrb[0].mxu0
      %v346 = vadd.f32 0.0, %v345
      %v347 = vpop.f32.mrb[0].mxu0
      %348 = vmatprep.mubr.bf16.mxu0 0
      %349 = vmatmul.mubr.bf16.gmra.mrb[0].mxu0 %v217
      %v350 = vpop.f32.mrb[0].mxu0
      %v351 = vadd.f32 0.0, %v350
      %v352 = vpop.f32.mrb[0].mxu0
      %v353 = vpop.f32.mrb[0].mxu0
      %v354 = vadd.f32 0.0, %v353
      %v355 = vpop.f32.mrb[0].mxu0
      %356 = vmatprep.mubr.bf16.mxu0 0
      %357 = vmatmul.mubr.bf16.gmra.mrb[0].mxu0 %v218
      %v358 = vpop.f32.mrb[0].mxu0
      %v359 = vadd.f32 0.0, %v358
      %v360 = vpop.f32.mrb[0].mxu0
      %v361 = vpop.f32.mrb[0].mxu0
      %v362 = vadd.f32 0.0, %v361
      %v363 = vpop.f32.mrb[0].mxu0
      %364 = vmatprep.mubr.bf16.mxu0 0
      %365 = vmatmul.mubr.bf16.gmra.mrb[0].mxu0 %v219
      %v366 = vpop.f32.mrb[0].mxu0
      %v367 = vadd.f32 0.0, %v366
      %v368 = vpop.f32.mrb[0].mxu0
      %v369 = vpop.f32.mrb[0].mxu0
      %v370 = vadd.f32 0.0, %v369
      %v371 = vpop.f32.mrb[0].mxu0
      %372 = vdwg.mxu0
      %373 = vst [vmem:[%s145] sm:$0xff] %v311
      %374 = vst [vmem:[%s145 + $0x8] sm:$0xff] %v314
      %375 = vst [vmem:[%s145 + $0x10] sm:$0xff] %v319
      %376 = vst [vmem:[%s145 + $0x18] sm:$0xff] %v322
      %377 = vst [vmem:[%s145 + $0x20] sm:$0xff] %v327
      %378 = vst [vmem:[%s145 + $0x28] sm:$0xff] %v330
      %379 = vst [vmem:[%s145 + $0x30] sm:$0xff] %v335
      %380 = vst [vmem:[%s145 + $0x38] sm:$0xff] %v338
      %381 = vst [vmem:[%s145 + $0x40] sm:$0xff] %v343
      %382 = vst [vmem:[%s145 + $0x48] sm:$0xff] %v346
      %383 = vst [vmem:[%s145 + $0x50] sm:$0xff] %v351
      %384 = vst [vmem:[%s145 + $0x58] sm:$0xff] %v354
      %385 = vst [vmem:[%s145 + $0x60] sm:$0xff] %v359
      %386 = vst [vmem:[%s145 + $0x68] sm:$0xff] %v362
      %387 = vst [vmem:[%s145 + $0x70] sm:$0xff] %v367
      %388 = vst [vmem:[%s145 + $0x78] sm:$0xff] %v370
      %s389 = smul.u32 16, %s13
      %p390 = scmp.lt.s32.totalorder %s389, 31
      %s391 = scalar_select %p390, %s389, 31
      %s392 = smul.addr %s391, 8
      %s393 = scalar_lea.vmem %s2, %s392
      // Predicated region
      $region29: #{forward.1} parent=27 // pred_check
        %p394 = pneg %p78
      $region30: #{forward.1} parent=27 // pred_check_branch
        %396 = sbr.rel (%p394) target = $region32
      $region31: #{forward.1} parent=27 // pred_region
        %s397 = smul.u32 16, %s13
      $region32: #{forward.1} parent=27 // pred_fallthru
        _
    $region28: #{forward.1} parent=5 // pred_fallthru
      _
    %p398 = scmp.le.s32.totalorder 2, %s8
    // Predicated region
    $region33: #{forward.1} parent=5 // pred_check
      %p399 = pneg %p398
    $region34: #{forward.1} parent=5 // pred_check_branch
      %401 = sbr.rel (%p399) target = $region36
    $region35: #{forward.1} parent=5 // pred_region
      %s402 = ssub.s32 %s8, 2
      // Predicated region
      $region37: #{forward.1} parent=35 // pred_check
        %p403 = pneg %p84
      $region38: #{forward.1} parent=35 // pred_check_branch
        %405 = sbr.rel (%p403) target = $region40
      $region39: #{forward.1} parent=35 // pred_region
        %s406 = smul.u32 16, %s14
        %p407 = scmp.lt.s32.totalorder %s406, 31
        %s408 = scalar_select %p407, %s406, 31
        %s409 = smul.addr %s408, 8
        %s410 = scalar_lea.vmem %s2, %s409
      $region40: #{forward.1} parent=35 // pred_fallthru
        _
    $region36: #{forward.1} parent=5 // pred_fallthru
      _
  $region6: #{forward.1} parent=0 // loop_footer
    %s12 = sadd.s32 1, %s8
  $region7: #{forward.1} parent=0 // loop_footer_branch
    %7 = sbr.rel target = $region3
  $region8: #{forward.1} parent=0 // loop_exit
    _

</llo_original>
